<compile_context>
chip_gen: v5e
topology: v5e:2x2
jax: 0.10.0
libtpu: 0.0.40
codegen_flags: <defaults>
</compile_context>

<pallas_src>
import functools

import jax
import jax.numpy as jnp
from jax.experimental import pallas as pl
from jax.experimental.pallas import tpu as pltpu


# Packed-parameter slab layout (f32, gate columns permuted (i,f,g,o) -> (i,f,o,g)):
#   rows 0:2          W_fused = We^T @ Wih^T          (2, 4H)
#   row  2            b_fused = be @ Wih^T + bih+bhh  (1, 4H)
#   rows 3:_WHH_ROW   zero padding (sublane alignment for W_hh)
#   rows _WHH_ROW:+H  W_hh^T                          (H, 4H)
_WHH_ROW = 8


def lstm_encoder_kernel(x_ref, p_ref, h_out_ref, gx_ref):
    """Fused (folded-embedding) LSTM encoder over the whole sequence.

    x_ref     : (T*B, 2)        raw coords for all timesteps (seq-major rows)
    p_ref     : (8 + Hpad, 4H)  packed parameter slab (see layout above)
    h_out_ref : (B, H)          final hidden state
    gx_ref    : (T*B, 4H)       VMEM scratch for the precomputed input-side gates
    """
    TB = x_ref.shape[0]
    B, H = h_out_ref.shape
    T = TB // B
    G4 = p_ref.shape[1]  # 4H

    # ---------- Prologue: runs once, off the serial recurrence path ----------
    x2d = x_ref[...]                                     # (T*B, 2)
    wf0 = p_ref[0:1, :]                                  # (1, 4H)
    wf1 = p_ref[1:2, :]                                  # (1, 4H)
    bf = p_ref[2:3, :]                                   # (1, 4H)
    # Embedding folded into W_ih: gates_x = x @ W_fused + b_fused.
    # K=2 is a bad MXU fit, so this is two broadcast FMAs on the VPU.
    gx_ref[...] = x2d[:, 0:1] * wf0 + x2d[:, 1:2] * wf1 + bf

    # Recurrent weight: cast once to bf16 (MXU-native); accumulation stays f32.
    whh_bf = p_ref[_WHH_ROW:_WHH_ROW + H, :].astype(jnp.bfloat16)   # (H, 4H)

    # Lane constants for the single-tanh gate activation:
    #   i/f/o lanes (0..3H):  sigmoid(x) = 0.5*tanh(0.5*x) + 0.5
    #   g   lanes (3H..4H):   tanh(x)    = 1.0*tanh(1.0*x) + 0.0
    lane = jax.lax.broadcasted_iota(jnp.int32, (1, G4), 1)
    s_vec = jnp.where(lane < 3 * H, 0.5, 1.0)            # pre-scale == post-scale
    b_vec = jnp.where(lane < 3 * H, 0.5, 0.0)

    # init_hidden = init_cell = zeros
    h = jnp.zeros((B, H), jnp.float32)
    c = jnp.zeros((B, H), jnp.float32)

    # ---------- Recurrence: fully unrolled (T is small and static) ----------
    for t in range(T):
        gates = gx_ref[t * B:(t + 1) * B, :] + jnp.dot(
            h.astype(jnp.bfloat16), whh_bf,
            preferred_element_type=jnp.float32)           # (B, 4H) f32

        # One EUP launch for all four gates (instead of sigmoid + tanh).
        act = jnp.tanh(gates * s_vec) * s_vec + b_vec     # (B, 4H)
        i_g = act[:, 0 * H:1 * H]
        f_g = act[:, 1 * H:2 * H]
        o_g = act[:, 2 * H:3 * H]
        g_g = act[:, 3 * H:4 * H]

        c = f_g * c + i_g * g_g
        h = o_g * jnp.tanh(c)

    h_out_ref[...] = h.astype(h_out_ref.dtype)


def _permute_gates_ifgo_to_ifog(w):
    """Reorder the trailing 4H gate axis from PyTorch (i, f, g, o) to (i, f, o, g)."""
    i, f, g, o = jnp.split(w, 4, axis=-1)
    return jnp.concatenate([i, f, o, g], axis=-1)


def prepare_params(params, *, hidden_dim):
    """ONE-TIME parameter fusion and packing (run at init, not per forward call).

    params (PyTorch layout, stored transposed for x @ W^T):
      we_t (2,E), be (1,E), wih_t (E,4H), bih (1,4H), whh_t (H,4H), bhh (1,4H)
    Returns a single f32 slab of shape (round_up(8+H, 8), 4H).
    """
    we_t, be, wih_t, bih, whh_t, bhh = params
    H = hidden_dim

    w_fused = _permute_gates_ifgo_to_ifog(we_t @ wih_t)             # (2, 4H)
    b_fused = _permute_gates_ifgo_to_ifog(be @ wih_t + bih + bhh)   # (1, 4H)
    whh_p = _permute_gates_ifgo_to_ifog(whh_t)                      # (H, 4H)

    rows_pad = ((_WHH_ROW + H + 7) // 8) * 8
    slab = jnp.zeros((rows_pad, 4 * H), jnp.float32)
    slab = slab.at[0:2, :].set(w_fused.astype(jnp.float32))
    slab = slab.at[2:3, :].set(b_fused.astype(jnp.float32))
    slab = slab.at[_WHH_ROW:_WHH_ROW + H, :].set(whh_p.astype(jnp.float32))
    return slab


@functools.partial(jax.jit, static_argnames=("hidden_dim",))
def vanilla_lstm_forward(batch_data, packed_params, *, hidden_dim):
    """batch_data: (T, B, 2) float32; packed_params from prepare_params.
    Returns h_n (state[0]) with shape (num_layer=1, B, H)."""
    T, B, two = batch_data.shape
    assert two == 2, "trailing coordinate dim must be 2"
    H = hidden_dim

    # The module does batch_data.view(-1, 2) for the embedding; collapse here so
    # the kernel needs no in-kernel reshape.  Rows are exactly T*B by construction.
    x2d = batch_data.reshape(T * B, 2)

    h_out = pl.pallas_call(
        lstm_encoder_kernel,
        out_shape=jax.ShapeDtypeStruct((B, H), jnp.float32),
        in_specs=[pl.BlockSpec(memory_space=pltpu.MemorySpace.VMEM)] * 2,
        out_specs=pl.BlockSpec(memory_space=pltpu.MemorySpace.VMEM),
        scratch_shapes=[pltpu.VMEM((T * B, 4 * H), jnp.float32)],
    )(x2d, packed_params)

    return h_out[None, :, :]   # state[0]: (num_layer=1, B, H)


def reference_forward(batch_data, params, *, hidden_dim):
    """Pure-JAX reference (PyTorch gate order, unfused, f32) for sanity checking."""
    T, B, _ = batch_data.shape
    H = hidden_dim
    we_t, be, wih_t, bih, whh_t, bhh = params
    emb = batch_data.reshape(-1, 2) @ we_t + be            # (T*B, E)
    emb = emb.reshape(T, B, -1)
    h = jnp.zeros((B, H), jnp.float32)
    c = jnp.zeros((B, H), jnp.float32)
    for t in range(T):
        gates = emb[t] @ wih_t + bih + h @ whh_t + bhh
        i = jax.nn.sigmoid(gates[:, 0 * H:1 * H])
        f = jax.nn.sigmoid(gates[:, 1 * H:2 * H])
        g = jnp.tanh(gates[:, 2 * H:3 * H])
        o = jax.nn.sigmoid(gates[:, 3 * H:4 * H])
        c = f * c + i * g
        h = o * jnp.tanh(c)
    return h[None, :, :]


if __name__ == "__main__":
    # Small shapes consistent with the module: E = args['Embedding']['Input_size'],
    # H = args['LSTMs']['Hidden_size'], num_layer = 1.
    T, B, E, H = 8, 8, 32, 32

    key = jax.random.PRNGKey(0)
    ks = jax.random.split(key, 7)
    scale = 0.1
    # Deterministic synthetic parameters (PyTorch shapes, stored transposed for x @ W^T).
    we_t  = scale * jax.random.normal(ks[0], (2, E), jnp.float32)       # Linear(2,E).weight^T
    be    = scale * jax.random.normal(ks[1], (1, E), jnp.float32)
    wih_t = scale * jax.random.normal(ks[2], (E, 4 * H), jnp.float32)   # W_ih^T (i,f,g,o)
    bih   = scale * jax.random.normal(ks[3], (1, 4 * H), jnp.float32)
    whh_t = scale * jax.random.normal(ks[4], (H, 4 * H), jnp.float32)   # W_hh^T (i,f,g,o)
    bhh   = scale * jax.random.normal(ks[5], (1, 4 * H), jnp.float32)
    params = (we_t, be, wih_t, bih, whh_t, bhh)

    batch_data = jax.random.normal(ks[6], (T, B, 2), jnp.float32)

    # One-time parameter fusion/packing (not in the per-call hot path).
    packed = jax.block_until_ready(prepare_params(params, hidden_dim=H))

    h_n = vanilla_lstm_forward(batch_data, packed, hidden_dim=H)
    h_n = jax.block_until_ready(h_n)

    h_ref = reference_forward(batch_data, params, hidden_dim=H)
    assert h_n.shape == (1, B, H)
    # bf16 recurrent-matmul operands + We@Wih fold reassociation loosen matching
    # vs. the pure-f32 reference; 5e-3 is comfortably above the observed error.
    assert jnp.allclose(h_n, h_ref, atol=5e-3, rtol=5e-3), "mismatch vs reference"

    # TODO(synk): VanillaLSTM.forward in the reference is `pass` (returns None) and the
    # obs_lack='enable' packed-sequence branch is empty; the implemented compute is
    # Encoder.forward (obs_lack='disable'), which is what the module actually defines.
    print("KERNEL_OK")
</pallas_src>

<mosaic_0001>
module attributes {stable_mosaic.version = 11 : i64} {
  func.func @lstm_encoder_kernel(%arg0: memref<64x2xf32, #tpu.memory_space<vmem>>, %arg1: memref<40x128xf32, #tpu.memory_space<vmem>>, %arg2: memref<8x32xf32, #tpu.memory_space<vmem>>, %arg3: memref<64x128xf32, #tpu.memory_space<vmem>>) attributes {dimension_semantics = [], scalar_prefetch = 0 : i64, scratch_operands = 1 : i64, tpu.core_type = #tpu.core_type<tc>} {
    %c0 = arith.constant 0 : index
    %c0_0 = arith.constant 0 : index
    %0 = vector.load %arg0[%c0, %c0_0] : memref<64x2xf32, #tpu.memory_space<vmem>>, vector<64x2xf32>
    %c0_1 = arith.constant 0 : index
    %c0_2 = arith.constant 0 : index
    %1 = vector.load %arg1[%c0_1, %c0_2] : memref<40x128xf32, #tpu.memory_space<vmem>>, vector<1x128xf32>
    %c1 = arith.constant 1 : index
    %c0_3 = arith.constant 0 : index
    %2 = vector.load %arg1[%c1, %c0_3] : memref<40x128xf32, #tpu.memory_space<vmem>>, vector<1x128xf32>
    %c2 = arith.constant 2 : index
    %c0_4 = arith.constant 0 : index
    %3 = vector.load %arg1[%c2, %c0_4] : memref<40x128xf32, #tpu.memory_space<vmem>>, vector<1x128xf32>
    %4 = vector.extract_strided_slice %0 {offsets = [0, 0], sizes = [64, 1], strides = [1, 1]} : vector<64x2xf32> to vector<64x1xf32>
    %5 = vector.broadcast %4 : vector<64x1xf32> to vector<64x128xf32>
    %6 = vector.broadcast %1 : vector<1x128xf32> to vector<64x128xf32>
    %7 = arith.mulf %5, %6 : vector<64x128xf32>
    %8 = vector.extract_strided_slice %0 {offsets = [0, 1], sizes = [64, 1], strides = [1, 1]} : vector<64x2xf32> to vector<64x1xf32>
    %9 = vector.broadcast %8 : vector<64x1xf32> to vector<64x128xf32>
    %10 = vector.broadcast %2 : vector<1x128xf32> to vector<64x128xf32>
    %11 = arith.mulf %9, %10 : vector<64x128xf32>
    %12 = arith.addf %7, %11 : vector<64x128xf32>
    %13 = vector.broadcast %3 : vector<1x128xf32> to vector<64x128xf32>
    %14 = arith.addf %12, %13 : vector<64x128xf32>
    %c0_5 = arith.constant 0 : index
    %c0_6 = arith.constant 0 : index
    %15 = vector.load %arg3[%c0_5, %c0_6] : memref<64x128xf32, #tpu.memory_space<vmem>>, vector<64x128xf32>
    tpu.vector_store %arg3[%c0_5, %c0_6], %14 {strides = array<i32>} : memref<64x128xf32, #tpu.memory_space<vmem>>, vector<64x128xf32>,
    %c8 = arith.constant 8 : index
    %c0_7 = arith.constant 0 : index
    %16 = vector.load %arg1[%c8, %c0_7] : memref<40x128xf32, #tpu.memory_space<vmem>>, vector<32x128xf32>
    %17 = arith.truncf %16 : vector<32x128xf32> to vector<32x128xbf16>
    %18 = tpu.iota {dimensions = array<i32: 1>} : vector<1x128xi32>
    %c96_i32 = arith.constant 96 : i32
    %19 = vector.broadcast %c96_i32 : i32 to vector<1x128xi32>
    %20 = arith.cmpi slt, %18, %19 : vector<1x128xi32>
    %cst = arith.constant 5.000000e-01 : f32
    %cst_8 = arith.constant 1.000000e+00 : f32
    %21 = vector.broadcast %cst : f32 to vector<1x128xf32>
    %22 = vector.broadcast %cst_8 : f32 to vector<1x128xf32>
    %23 = arith.select %20, %21, %22 : vector<1x128xi1>, vector<1x128xf32>
    %c96_i32_9 = arith.constant 96 : i32
    %24 = vector.broadcast %c96_i32_9 : i32 to vector<1x128xi32>
    %25 = arith.cmpi slt, %18, %24 : vector<1x128xi32>
    %cst_10 = arith.constant 5.000000e-01 : f32
    %cst_11 = arith.constant 0.000000e+00 : f32
    %26 = vector.broadcast %cst_10 : f32 to vector<1x128xf32>
    %27 = vector.broadcast %cst_11 : f32 to vector<1x128xf32>
    %28 = arith.select %25, %26, %27 : vector<1x128xi1>, vector<1x128xf32>
    %cst_12 = arith.constant 0.000000e+00 : f32
    %29 = vector.broadcast %cst_12 : f32 to vector<8x32xf32>
    %cst_13 = arith.constant 0.000000e+00 : f32
    %30 = vector.broadcast %cst_13 : f32 to vector<8x32xf32>
    %c0_14 = arith.constant 0 : index
    %c0_15 = arith.constant 0 : index
    %31 = vector.load %arg3[%c0_14, %c0_15] : memref<64x128xf32, #tpu.memory_space<vmem>>, vector<8x128xf32>
    %32 = arith.truncf %29 : vector<8x32xf32> to vector<8x32xbf16>
    %cst_16 = arith.constant dense<0.000000e+00> : vector<8x128xf32>
    %33 = tpu.matmul %32, %17, %cst_16 {dimension_numbers = #tpu.dot_dimension_numbers<[1], [0], [0], [1], [0, 0, 1, 1], [], []>} : vector<8x32xbf16>, vector<32x128xbf16>, vector<8x128xf32> -> vector<8x128xf32>
    %34 = arith.addf %31, %33 : vector<8x128xf32>
    %35 = vector.broadcast %23 : vector<1x128xf32> to vector<8x128xf32>
    %36 = arith.mulf %34, %35 : vector<8x128xf32>
    %37 = math.tanh %36 : vector<8x128xf32>
    %38 = vector.broadcast %23 : vector<1x128xf32> to vector<8x128xf32>
    %39 = arith.mulf %37, %38 : vector<8x128xf32>
    %40 = vector.broadcast %28 : vector<1x128xf32> to vector<8x128xf32>
    %41 = arith.addf %39, %40 : vector<8x128xf32>
    %42 = vector.extract_strided_slice %41 {offsets = [0, 0], sizes = [8, 32], strides = [1, 1]} : vector<8x128xf32> to vector<8x32xf32>
    %43 = vector.extract_strided_slice %41 {offsets = [0, 32], sizes = [8, 32], strides = [1, 1]} : vector<8x128xf32> to vector<8x32xf32>
    %44 = vector.extract_strided_slice %41 {offsets = [0, 64], sizes = [8, 32], strides = [1, 1]} : vector<8x128xf32> to vector<8x32xf32>
    %45 = vector.extract_strided_slice %41 {offsets = [0, 96], sizes = [8, 32], strides = [1, 1]} : vector<8x128xf32> to vector<8x32xf32>
    %46 = arith.mulf %43, %30 : vector<8x32xf32>
    %47 = arith.mulf %42, %45 : vector<8x32xf32>
    %48 = arith.addf %46, %47 : vector<8x32xf32>
    %49 = math.tanh %48 : vector<8x32xf32>
    %50 = arith.mulf %44, %49 : vector<8x32xf32>
    %c8_17 = arith.constant 8 : index
    %c0_18 = arith.constant 0 : index
    %51 = vector.load %arg3[%c8_17, %c0_18] : memref<64x128xf32, #tpu.memory_space<vmem>>, vector<8x128xf32>
    %52 = arith.truncf %50 : vector<8x32xf32> to vector<8x32xbf16>
    %cst_19 = arith.constant dense<0.000000e+00> : vector<8x128xf32>
    %53 = tpu.matmul %52, %17, %cst_19 {dimension_numbers = #tpu.dot_dimension_numbers<[1], [0], [0], [1], [0, 0, 1, 1], [], []>} : vector<8x32xbf16>, vector<32x128xbf16>, vector<8x128xf32> -> vector<8x128xf32>
    %54 = arith.addf %51, %53 : vector<8x128xf32>
    %55 = vector.broadcast %23 : vector<1x128xf32> to vector<8x128xf32>
    %56 = arith.mulf %54, %55 : vector<8x128xf32>
    %57 = math.tanh %56 : vector<8x128xf32>
    %58 = vector.broadcast %23 : vector<1x128xf32> to vector<8x128xf32>
    %59 = arith.mulf %57, %58 : vector<8x128xf32>
    %60 = vector.broadcast %28 : vector<1x128xf32> to vector<8x128xf32>
    %61 = arith.addf %59, %60 : vector<8x128xf32>
    %62 = vector.extract_strided_slice %61 {offsets = [0, 0], sizes = [8, 32], strides = [1, 1]} : vector<8x128xf32> to vector<8x32xf32>
    %63 = vector.extract_strided_slice %61 {offsets = [0, 32], sizes = [8, 32], strides = [1, 1]} : vector<8x128xf32> to vector<8x32xf32>
    %64 = vector.extract_strided_slice %61 {offsets = [0, 64], sizes = [8, 32], strides = [1, 1]} : vector<8x128xf32> to vector<8x32xf32>
    %65 = vector.extract_strided_slice %61 {offsets = [0, 96], sizes = [8, 32], strides = [1, 1]} : vector<8x128xf32> to vector<8x32xf32>
    %66 = arith.mulf %63, %48 : vector<8x32xf32>
    %67 = arith.mulf %62, %65 : vector<8x32xf32>
    %68 = arith.addf %66, %67 : vector<8x32xf32>
    %69 = math.tanh %68 : vector<8x32xf32>
    %70 = arith.mulf %64, %69 : vector<8x32xf32>
    %c16 = arith.constant 16 : index
    %c0_20 = arith.constant 0 : index
    %71 = vector.load %arg3[%c16, %c0_20] : memref<64x128xf32, #tpu.memory_space<vmem>>, vector<8x128xf32>
    %72 = arith.truncf %70 : vector<8x32xf32> to vector<8x32xbf16>
    %cst_21 = arith.constant dense<0.000000e+00> : vector<8x128xf32>
    %73 = tpu.matmul %72, %17, %cst_21 {dimension_numbers = #tpu.dot_dimension_numbers<[1], [0], [0], [1], [0, 0, 1, 1], [], []>} : vector<8x32xbf16>, vector<32x128xbf16>, vector<8x128xf32> -> vector<8x128xf32>
    %74 = arith.addf %71, %73 : vector<8x128xf32>
    %75 = vector.broadcast %23 : vector<1x128xf32> to vector<8x128xf32>
    %76 = arith.mulf %74, %75 : vector<8x128xf32>
    %77 = math.tanh %76 : vector<8x128xf32>
    %78 = vector.broadcast %23 : vector<1x128xf32> to vector<8x128xf32>
    %79 = arith.mulf %77, %78 : vector<8x128xf32>
    %80 = vector.broadcast %28 : vector<1x128xf32> to vector<8x128xf32>
    %81 = arith.addf %79, %80 : vector<8x128xf32>
    %82 = vector.extract_strided_slice %81 {offsets = [0, 0], sizes = [8, 32], strides = [1, 1]} : vector<8x128xf32> to vector<8x32xf32>
    %83 = vector.extract_strided_slice %81 {offsets = [0, 32], sizes = [8, 32], strides = [1, 1]} : vector<8x128xf32> to vector<8x32xf32>
    %84 = vector.extract_strided_slice %81 {offsets = [0, 64], sizes = [8, 32], strides = [1, 1]} : vector<8x128xf32> to vector<8x32xf32>
    %85 = vector.extract_strided_slice %81 {offsets = [0, 96], sizes = [8, 32], strides = [1, 1]} : vector<8x128xf32> to vector<8x32xf32>
    %86 = arith.mulf %83, %68 : vector<8x32xf32>
    %87 = arith.mulf %82, %85 : vector<8x32xf32>
    %88 = arith.addf %86, %87 : vector<8x32xf32>
    %89 = math.tanh %88 : vector<8x32xf32>
    %90 = arith.mulf %84, %89 : vector<8x32xf32>
    %c24 = arith.constant 24 : index
    %c0_22 = arith.constant 0 : index
    %91 = vector.load %arg3[%c24, %c0_22] : memref<64x128xf32, #tpu.memory_space<vmem>>, vector<8x128xf32>
    %92 = arith.truncf %90 : vector<8x32xf32> to vector<8x32xbf16>
    %cst_23 = arith.constant dense<0.000000e+00> : vector<8x128xf32>
    %93 = tpu.matmul %92, %17, %cst_23 {dimension_numbers = #tpu.dot_dimension_numbers<[1], [0], [0], [1], [0, 0, 1, 1], [], []>} : vector<8x32xbf16>, vector<32x128xbf16>, vector<8x128xf32> -> vector<8x128xf32>
    %94 = arith.addf %91, %93 : vector<8x128xf32>
    %95 = vector.broadcast %23 : vector<1x128xf32> to vector<8x128xf32>
    %96 = arith.mulf %94, %95 : vector<8x128xf32>
    %97 = math.tanh %96 : vector<8x128xf32>
    %98 = vector.broadcast %23 : vector<1x128xf32> to vector<8x128xf32>
    %99 = arith.mulf %97, %98 : vector<8x128xf32>
    %100 = vector.broadcast %28 : vector<1x128xf32> to vector<8x128xf32>
    %101 = arith.addf %99, %100 : vector<8x128xf32>
    %102 = vector.extract_strided_slice %101 {offsets = [0, 0], sizes = [8, 32], strides = [1, 1]} : vector<8x128xf32> to vector<8x32xf32>
    %103 = vector.extract_strided_slice %101 {offsets = [0, 32], sizes = [8, 32], strides = [1, 1]} : vector<8x128xf32> to vector<8x32xf32>
    %104 = vector.extract_strided_slice %101 {offsets = [0, 64], sizes = [8, 32], strides = [1, 1]} : vector<8x128xf32> to vector<8x32xf32>
    %105 = vector.extract_strided_slice %101 {offsets = [0, 96], sizes = [8, 32], strides = [1, 1]} : vector<8x128xf32> to vector<8x32xf32>
    %106 = arith.mulf %103, %88 : vector<8x32xf32>
    %107 = arith.mulf %102, %105 : vector<8x32xf32>
    %108 = arith.addf %106, %107 : vector<8x32xf32>
    %109 = math.tanh %108 : vector<8x32xf32>
    %110 = arith.mulf %104, %109 : vector<8x32xf32>
    %c32 = arith.constant 32 : index
    %c0_24 = arith.constant 0 : index
    %111 = vector.load %arg3[%c32, %c0_24] : memref<64x128xf32, #tpu.memory_space<vmem>>, vector<8x128xf32>
    %112 = arith.truncf %110 : vector<8x32xf32> to vector<8x32xbf16>
    %cst_25 = arith.constant dense<0.000000e+00> : vector<8x128xf32>
    %113 = tpu.matmul %112, %17, %cst_25 {dimension_numbers = #tpu.dot_dimension_numbers<[1], [0], [0], [1], [0, 0, 1, 1], [], []>} : vector<8x32xbf16>, vector<32x128xbf16>, vector<8x128xf32> -> vector<8x128xf32>
    %114 = arith.addf %111, %113 : vector<8x128xf32>
    %115 = vector.broadcast %23 : vector<1x128xf32> to vector<8x128xf32>
    %116 = arith.mulf %114, %115 : vector<8x128xf32>
    %117 = math.tanh %116 : vector<8x128xf32>
    %118 = vector.broadcast %23 : vector<1x128xf32> to vector<8x128xf32>
    %119 = arith.mulf %117, %118 : vector<8x128xf32>
    %120 = vector.broadcast %28 : vector<1x128xf32> to vector<8x128xf32>
    %121 = arith.addf %119, %120 : vector<8x128xf32>
    %122 = vector.extract_strided_slice %121 {offsets = [0, 0], sizes = [8, 32], strides = [1, 1]} : vector<8x128xf32> to vector<8x32xf32>
    %123 = vector.extract_strided_slice %121 {offsets = [0, 32], sizes = [8, 32], strides = [1, 1]} : vector<8x128xf32> to vector<8x32xf32>
    %124 = vector.extract_strided_slice %121 {offsets = [0, 64], sizes = [8, 32], strides = [1, 1]} : vector<8x128xf32> to vector<8x32xf32>
    %125 = vector.extract_strided_slice %121 {offsets = [0, 96], sizes = [8, 32], strides = [1, 1]} : vector<8x128xf32> to vector<8x32xf32>
    %126 = arith.mulf %123, %108 : vector<8x32xf32>
    %127 = arith.mulf %122, %125 : vector<8x32xf32>
    %128 = arith.addf %126, %127 : vector<8x32xf32>
    %129 = math.tanh %128 : vector<8x32xf32>
    %130 = arith.mulf %124, %129 : vector<8x32xf32>
    %c40 = arith.constant 40 : index
    %c0_26 = arith.constant 0 : index
    %131 = vector.load %arg3[%c40, %c0_26] : memref<64x128xf32, #tpu.memory_space<vmem>>, vector<8x128xf32>
    %132 = arith.truncf %130 : vector<8x32xf32> to vector<8x32xbf16>
    %cst_27 = arith.constant dense<0.000000e+00> : vector<8x128xf32>
    %133 = tpu.matmul %132, %17, %cst_27 {dimension_numbers = #tpu.dot_dimension_numbers<[1], [0], [0], [1], [0, 0, 1, 1], [], []>} : vector<8x32xbf16>, vector<32x128xbf16>, vector<8x128xf32> -> vector<8x128xf32>
    %134 = arith.addf %131, %133 : vector<8x128xf32>
    %135 = vector.broadcast %23 : vector<1x128xf32> to vector<8x128xf32>
    %136 = arith.mulf %134, %135 : vector<8x128xf32>
    %137 = math.tanh %136 : vector<8x128xf32>
    %138 = vector.broadcast %23 : vector<1x128xf32> to vector<8x128xf32>
    %139 = arith.mulf %137, %138 : vector<8x128xf32>
    %140 = vector.broadcast %28 : vector<1x128xf32> to vector<8x128xf32>
    %141 = arith.addf %139, %140 : vector<8x128xf32>
    %142 = vector.extract_strided_slice %141 {offsets = [0, 0], sizes = [8, 32], strides = [1, 1]} : vector<8x128xf32> to vector<8x32xf32>
    %143 = vector.extract_strided_slice %141 {offsets = [0, 32], sizes = [8, 32], strides = [1, 1]} : vector<8x128xf32> to vector<8x32xf32>
    %144 = vector.extract_strided_slice %141 {offsets = [0, 64], sizes = [8, 32], strides = [1, 1]} : vector<8x128xf32> to vector<8x32xf32>
    %145 = vector.extract_strided_slice %141 {offsets = [0, 96], sizes = [8, 32], strides = [1, 1]} : vector<8x128xf32> to vector<8x32xf32>
    %146 = arith.mulf %143, %128 : vector<8x32xf32>
    %147 = arith.mulf %142, %145 : vector<8x32xf32>
    %148 = arith.addf %146, %147 : vector<8x32xf32>
    %149 = math.tanh %148 : vector<8x32xf32>
    %150 = arith.mulf %144, %149 : vector<8x32xf32>
    %c48 = arith.constant 48 : index
    %c0_28 = arith.constant 0 : index
    %151 = vector.load %arg3[%c48, %c0_28] : memref<64x128xf32, #tpu.memory_space<vmem>>, vector<8x128xf32>
    %152 = arith.truncf %150 : vector<8x32xf32> to vector<8x32xbf16>
    %cst_29 = arith.constant dense<0.000000e+00> : vector<8x128xf32>
    %153 = tpu.matmul %152, %17, %cst_29 {dimension_numbers = #tpu.dot_dimension_numbers<[1], [0], [0], [1], [0, 0, 1, 1], [], []>} : vector<8x32xbf16>, vector<32x128xbf16>, vector<8x128xf32> -> vector<8x128xf32>
    %154 = arith.addf %151, %153 : vector<8x128xf32>
    %155 = vector.broadcast %23 : vector<1x128xf32> to vector<8x128xf32>
    %156 = arith.mulf %154, %155 : vector<8x128xf32>
    %157 = math.tanh %156 : vector<8x128xf32>
    %158 = vector.broadcast %23 : vector<1x128xf32> to vector<8x128xf32>
    %159 = arith.mulf %157, %158 : vector<8x128xf32>
    %160 = vector.broadcast %28 : vector<1x128xf32> to vector<8x128xf32>
    %161 = arith.addf %159, %160 : vector<8x128xf32>
    %162 = vector.extract_strided_slice %161 {offsets = [0, 0], sizes = [8, 32], strides = [1, 1]} : vector<8x128xf32> to vector<8x32xf32>
    %163 = vector.extract_strided_slice %161 {offsets = [0, 32], sizes = [8, 32], strides = [1, 1]} : vector<8x128xf32> to vector<8x32xf32>
    %164 = vector.extract_strided_slice %161 {offsets = [0, 64], sizes = [8, 32], strides = [1, 1]} : vector<8x128xf32> to vector<8x32xf32>
    %165 = vector.extract_strided_slice %161 {offsets = [0, 96], sizes = [8, 32], strides = [1, 1]} : vector<8x128xf32> to vector<8x32xf32>
    %166 = arith.mulf %163, %148 : vector<8x32xf32>
    %167 = arith.mulf %162, %165 : vector<8x32xf32>
    %168 = arith.addf %166, %167 : vector<8x32xf32>
    %169 = math.tanh %168 : vector<8x32xf32>
    %170 = arith.mulf %164, %169 : vector<8x32xf32>
    %c56 = arith.constant 56 : index
    %c0_30 = arith.constant 0 : index
    %171 = vector.load %arg3[%c56, %c0_30] : memref<64x128xf32, #tpu.memory_space<vmem>>, vector<8x128xf32>
    %172 = arith.truncf %170 : vector<8x32xf32> to vector<8x32xbf16>
    %cst_31 = arith.constant dense<0.000000e+00> : vector<8x128xf32>
    %173 = tpu.matmul %172, %17, %cst_31 {dimension_numbers = #tpu.dot_dimension_numbers<[1], [0], [0], [1], [0, 0, 1, 1], [], []>} : vector<8x32xbf16>, vector<32x128xbf16>, vector<8x128xf32> -> vector<8x128xf32>
    %174 = arith.addf %171, %173 : vector<8x128xf32>
    %175 = vector.broadcast %23 : vector<1x128xf32> to vector<8x128xf32>
    %176 = arith.mulf %174, %175 : vector<8x128xf32>
    %177 = math.tanh %176 : vector<8x128xf32>
    %178 = vector.broadcast %23 : vector<1x128xf32> to vector<8x128xf32>
    %179 = arith.mulf %177, %178 : vector<8x128xf32>
    %180 = vector.broadcast %28 : vector<1x128xf32> to vector<8x128xf32>
    %181 = arith.addf %179, %180 : vector<8x128xf32>
    %182 = vector.extract_strided_slice %181 {offsets = [0, 0], sizes = [8, 32], strides = [1, 1]} : vector<8x128xf32> to vector<8x32xf32>
    %183 = vector.extract_strided_slice %181 {offsets = [0, 32], sizes = [8, 32], strides = [1, 1]} : vector<8x128xf32> to vector<8x32xf32>
    %184 = vector.extract_strided_slice %181 {offsets = [0, 64], sizes = [8, 32], strides = [1, 1]} : vector<8x128xf32> to vector<8x32xf32>
    %185 = vector.extract_strided_slice %181 {offsets = [0, 96], sizes = [8, 32], strides = [1, 1]} : vector<8x128xf32> to vector<8x32xf32>
    %186 = arith.mulf %183, %168 : vector<8x32xf32>
    %187 = arith.mulf %182, %185 : vector<8x32xf32>
    %188 = arith.addf %186, %187 : vector<8x32xf32>
    %189 = math.tanh %188 : vector<8x32xf32>
    %190 = arith.mulf %184, %189 : vector<8x32xf32>
    %c0_32 = arith.constant 0 : index
    %c0_33 = arith.constant 0 : index
    %191 = vector.load %arg2[%c0_32, %c0_33] : memref<8x32xf32, #tpu.memory_space<vmem>>, vector<8x32xf32>
    tpu.vector_store %arg2[%c0_32, %c0_33], %190 {strides = array<i32>} : memref<8x32xf32, #tpu.memory_space<vmem>>, vector<8x32xf32>,
    return
  }
}

</mosaic_0001>

<llo_original>
// kernel: vanilla_lstm_forward.1
$region0: #{vanilla_lstm_forward.1}
  #allocation0 [shape = 'u32[]', space=smem, size = 0x4, offset = 0x4, fixed_abs, tag = 'smem constant byte address 0x4 - core index']
  #allocation1 [shape = 'u32[72,128]{1,0:T(1,128)}', space=vmem, size = 0x9000, scoped, tag = 'internal scratch']
  #allocation2 [shape = 'f32[64,128]{1,0:T(8,128)}', space=vmem, size = 0x8000, scoped, tag = 'scratch operand']
  %s0 = inlined_call_operand.vmem [shape: f32[64,2], index: 0, kind: input, shape index: {}]
  %s1 = inlined_call_operand.vmem [shape: f32[40,128], index: 1, kind: input, shape index: {}]
  %s2 = inlined_call_operand.hbm [shape: f32[8,32], index: 2, kind: output, shape index: {}]
  %s3 = sld [smem:[#allocation0]]
  $region18: #{vanilla_lstm_forward.1} parent=0
    _
  %s5 = ssub.s32 1, %s3
  %s6 = scalar_select 0, %s5, %s3
  $region1: #{vanilla_lstm_forward.1} parent=0
    #allocation3 [shape = 'u8[4096]{0}', space=vmem, size = 0x1000, scoped, tag = 'output window, operand 0, single buffered']
    #allocation4 [shape = 's32[1]{0}', space=sflag, size = 0x4, scoped, tag = 'scoped memory for vanilla_lstm_forward.1']
    %7 = vsyncpa [#allocation4], 0
    // Predicated region
    $region2: #{vanilla_lstm_forward.1} parent=1 // pred_check
      _
    $region3: #{vanilla_lstm_forward.1} parent=1 // pred_check_branch
      %9 = sbr.rel (0) target = $region5
    $region4: #{vanilla_lstm_forward.1} parent=1 // pred_region
      _
    $region5: #{vanilla_lstm_forward.1} parent=1 // pred_fallthru
      _
    // Predicated region
    $region6: #{vanilla_lstm_forward.1} parent=1 // pred_check
      _
    $region7: #{vanilla_lstm_forward.1} parent=1 // pred_check_branch
      %11 = sbr.rel (0) target = $region9
    $region8: #{vanilla_lstm_forward.1} parent=1 // pred_region
      _
    $region9: #{vanilla_lstm_forward.1} parent=1 // pred_fallthru
      _
    %v13 = vld [vmem:[%s0] sm:$0xff]
    %v14 = vld [vmem:[%s0 + $0x8] sm:$0xff]
    %v15 = vld [vmem:[%s0 + $0x10] sm:$0xff]
    %v16 = vld [vmem:[%s0 + $0x18] sm:$0xff]
    %v17 = vld [vmem:[%s0 + $0x20] sm:$0xff]
    %v18 = vld [vmem:[%s0 + $0x28] sm:$0xff]
    %v19 = vld [vmem:[%s0 + $0x30] sm:$0xff]
    %v20 = vld [vmem:[%s0 + $0x38] sm:$0xff]
    %v21 = vld [vmem:[%s1] sm:$0x1]
    %v22 = vld [vmem:[%s1 + $0x1] sm:$0x1]
    %v23 = vld [vmem:[%s1 + $0x2] sm:$0x1]
    %25 = vset.pattern.permute.xlu0 0
    %26 = vperm.xlu0 %25, %v13
    %v27 = vpop.permute.xlu0 %26
    %30 = vset.pattern.permute.xlu0 0
    %31 = vperm.xlu0 %30, %v14
    %v32 = vpop.permute.xlu0 %31
    %35 = vset.pattern.permute.xlu0 0
    %36 = vperm.xlu0 %35, %v15
    %v37 = vpop.permute.xlu0 %36
    %40 = vset.pattern.permute.xlu0 0
    %41 = vperm.xlu0 %40, %v16
    %v42 = vpop.permute.xlu0 %41
    %45 = vset.pattern.permute.xlu0 0
    %46 = vperm.xlu0 %45, %v17
    %v47 = vpop.permute.xlu0 %46
    %50 = vset.pattern.permute.xlu0 0
    %51 = vperm.xlu0 %50, %v18
    %v52 = vpop.permute.xlu0 %51
    %55 = vset.pattern.permute.xlu0 0
    %56 = vperm.xlu0 %55, %v19
    %v57 = vpop.permute.xlu0 %56
    %60 = vset.pattern.permute.xlu0 0
    %61 = vperm.xlu0 %60, %v20
    %v62 = vpop.permute.xlu0 %61
    %v64 = vperm.slane %v21, 0
    %v65 = vmul.f32 %v27, %v64
    %v66 = vmul.f32 %v32, %v64
    %v67 = vmul.f32 %v37, %v64
    %v68 = vmul.f32 %v42, %v64
    %v69 = vmul.f32 %v47, %v64
    %v70 = vmul.f32 %v52, %v64
    %v71 = vmul.f32 %v57, %v64
    %v72 = vmul.f32 %v62, %v64
    %73 = vset.pattern.permute.xlu0 1
    %74 = vperm.xlu0 %73, %v13
    %v75 = vpop.permute.xlu0 %74
    %77 = vset.pattern.permute.xlu0 1
    %78 = vperm.xlu0 %77, %v14
    %v79 = vpop.permute.xlu0 %78
    %81 = vset.pattern.permute.xlu0 1
    %82 = vperm.xlu0 %81, %v15
    %v83 = vpop.permute.xlu0 %82
    %85 = vset.pattern.permute.xlu0 1
    %86 = vperm.xlu0 %85, %v16
    %v87 = vpop.permute.xlu0 %86
    %89 = vset.pattern.permute.xlu0 1
    %90 = vperm.xlu0 %89, %v17
    %v91 = vpop.permute.xlu0 %90
    %93 = vset.pattern.permute.xlu0 1
    %94 = vperm.xlu0 %93, %v18
    %v95 = vpop.permute.xlu0 %94
    %97 = vset.pattern.permute.xlu0 1
    %98 = vperm.xlu0 %97, %v19
    %v99 = vpop.permute.xlu0 %98
    %101 = vset.pattern.permute.xlu0 1
    %102 = vperm.xlu0 %101, %v20
    %v103 = vpop.permute.xlu0 %102
    %v105 = vperm.slane %v22, 0
    %v106 = vmul.f32 %v75, %v105
    %v107 = vmul.f32 %v79, %v105
    %v108 = vmul.f32 %v83, %v105
    %v109 = vmul.f32 %v87, %v105
    %v110 = vmul.f32 %v91, %v105
    %v111 = vmul.f32 %v95, %v105
    %v112 = vmul.f32 %v99, %v105
    %v113 = vmul.f32 %v103, %v105
    %v114 = vadd.f32 %v65, %v106
    %v115 = vadd.f32 %v66, %v107
    %v116 = vadd.f32 %v67, %v108
    %v117 = vadd.f32 %v68, %v109
    %v118 = vadd.f32 %v69, %v110
    %v119 = vadd.f32 %v70, %v111
    %v120 = vadd.f32 %v71, %v112
    %v121 = vadd.f32 %v72, %v113
    %v122 = vperm.slane %v23, 0
    %v123 = vadd.f32 %v114, %v122
    %v124 = vadd.f32 %v115, %v122
    %v125 = vadd.f32 %v116, %v122
    %v126 = vadd.f32 %v117, %v122
    %v127 = vadd.f32 %v118, %v122
    %v128 = vadd.f32 %v119, %v122
    %v129 = vadd.f32 %v120, %v122
    %v130 = vadd.f32 %v121, %v122
    %131 = vst [vmem:[#allocation2] sm:$0xff] %v123
    %132 = vst [vmem:[#allocation2 + $0x8] sm:$0xff] %v124
    %133 = vst [vmem:[#allocation2 + $0x10] sm:$0xff] %v125
    %134 = vst [vmem:[#allocation2 + $0x18] sm:$0xff] %v126
    %135 = vst [vmem:[#allocation2 + $0x20] sm:$0xff] %v127
    %136 = vst [vmem:[#allocation2 + $0x28] sm:$0xff] %v128
    %137 = vst [vmem:[#allocation2 + $0x30] sm:$0xff] %v129
    %138 = vst [vmem:[#allocation2 + $0x38] sm:$0xff] %v130
    %v139 = vld [vmem:[%s1 + $0x8] sm:$0xff]
    %v140 = vld [vmem:[%s1 + $0x10] sm:$0xff]
    %v141 = vld [vmem:[%s1 + $0x18] sm:$0xff]
    %v142 = vld [vmem:[%s1 + $0x20] sm:$0xff]
    %v143 = vpack.c.bf16 %v140, %v139
    %v144 = vpack.c.bf16 %v142, %v141
    %v145 = vlaneseq
    %v146 = vand.u32 %v145, 127
    %vm147 = vcmp.lt.s32.totalorder %v146, 96
    %v148 = vsel %vm147, 0.5, 1.0
    %v149 = vsel %vm147, 0.5, 0.0
    %v150 = vld [vmem:[#allocation2] sm:$0xff]
    %vm151 = vcmask 261120
    %v153 = vsel %vm151, 0, 0
    %155 = vmatpush.bf16.msra.mxu0 0
    %156 = vmatpush.bf16.msra.mxu0 0
    %157 = vmatpush.bf16.msra.mxu0 0
    %158 = vmatpush.bf16.msra.mxu0 0
    %159 = vmatpush.bf16.msra.mxu0 0
    %160 = vmatpush.bf16.msra.mxu0 0
    %161 = vmatpush.bf16.msra.mxu0 %v144
    %162 = vmatpush.bf16.msra.mxu0 %v143
    %163 = vmatmul.bf16.gmra.mxu0 %v153
    %v164 = vpop.f32.mrf.mxu0
    %v165 = vadd.f32 0.0, %v164
    %v166 = vpop.f32.mrf.mxu0
    %167 = vdwg.mxu0
    %v168 = vadd.f32 %v150, %v165
    %v169 = vmul.f32 %v168, %v148
    %v170 = vtanh.pop %v169
    %v171 = vmul.f32 %v170, %v148
    %v172 = vadd.f32 %v171, %v149
    %v173 = vmul.f32 %v172, 0.0
    %175 = vrot.lane.b32.xlu0 %v172, 32
    %v176 = vpop.permute.xlu0 %175
    %v178 = vmul.f32 %v172, %v176
    %180 = vrot.lane.b32.xlu0 %v178, 32
    %v181 = vpop.permute.xlu0 %180
    %v183 = vadd.f32 %v173, %v181
    %v184 = vtanh.pop %v183
    %186 = vrot.lane.b32.xlu0 %v184, 32
    %v187 = vpop.permute.xlu0 %186
    %v189 = vmul.f32 %v172, %v187
    %v190 = vld [vmem:[#allocation2 + $0x8] sm:$0xff]
    %v191 = vpack.c.bf16 %v189, %v189
    %193 = vrot.lane.b32.xlu0 %v191, 64
    %v194 = vpop.permute.xlu0 %193
    %v196 = vsel %vm151, %v194, 0
    %198 = vmatpush.bf16.msra.mxu0 0
    %199 = vmatpush.bf16.msra.mxu0 0
    %200 = vmatpush.bf16.msra.mxu0 0
    %201 = vmatpush.bf16.msra.mxu0 0
    %202 = vmatpush.bf16.msra.mxu0 0
    %203 = vmatpush.bf16.msra.mxu0 0
    %204 = vmatpush.bf16.msra.mxu0 %v144
    %205 = vmatpush.bf16.msra.mxu0 %v143
    %206 = vmatmul.bf16.gmra.mxu0 %v196
    %v207 = vpop.f32.mrf.mxu0
    %v208 = vadd.f32 0.0, %v207
    %v209 = vpop.f32.mrf.mxu0
    %210 = vdwg.mxu0
    %v211 = vadd.f32 %v190, %v208
    %v212 = vmul.f32 %v211, %v148
    %v213 = vtanh.pop %v212
    %v214 = vmul.f32 %v213, %v148
    %v215 = vadd.f32 %v214, %v149
    %v216 = vmul.f32 %v215, %v183
    %218 = vrot.lane.b32.xlu0 %v215, 32
    %v219 = vpop.permute.xlu0 %218
    %v221 = vmul.f32 %v215, %v219
    %223 = vrot.lane.b32.xlu0 %v221, 32
    %v224 = vpop.permute.xlu0 %223
    %v226 = vadd.f32 %v216, %v224
    %v227 = vtanh.pop %v226
    %229 = vrot.lane.b32.xlu0 %v227, 32
    %v230 = vpop.permute.xlu0 %229
    %v232 = vmul.f32 %v215, %v230
    %v233 = vld [vmem:[#allocation2 + $0x10] sm:$0xff]
    %v234 = vpack.c.bf16 %v232, %v232
    %236 = vrot.lane.b32.xlu0 %v234, 64
    %v237 = vpop.permute.xlu0 %236
    %v239 = vsel %vm151, %v237, 0
    %241 = vmatpush.bf16.msra.mxu0 0
    %242 = vmatpush.bf16.msra.mxu0 0
    %243 = vmatpush.bf16.msra.mxu0 0
    %244 = vmatpush.bf16.msra.mxu0 0
    %245 = vmatpush.bf16.msra.mxu0 0
    %246 = vmatpush.bf16.msra.mxu0 0
    %247 = vmatpush.bf16.msra.mxu0 %v144
    %248 = vmatpush.bf16.msra.mxu0 %v143
    %249 = vmatmul.bf16.gmra.mxu0 %v239
    %v250 = vpop.f32.mrf.mxu0
    %v251 = vadd.f32 0.0, %v250
    %v252 = vpop.f32.mrf.mxu0
    %253 = vdwg.mxu0
    %v254 = vadd.f32 %v233, %v251
    %v255 = vmul.f32 %v254, %v148
    %v256 = vtanh.pop %v255
    %v257 = vmul.f32 %v256, %v148
    %v258 = vadd.f32 %v257, %v149
    %v259 = vmul.f32 %v258, %v226
    %261 = vrot.lane.b32.xlu0 %v258, 32
    %v262 = vpop.permute.xlu0 %261
    %v264 = vmul.f32 %v258, %v262
    %266 = vrot.lane.b32.xlu0 %v264, 32
    %v267 = vpop.permute.xlu0 %266
    %v269 = vadd.f32 %v259, %v267
    %v270 = vtanh.pop %v269
    %272 = vrot.lane.b32.xlu0 %v270, 32
    %v273 = vpop.permute.xlu0 %272
    %v275 = vmul.f32 %v258, %v273
    %v276 = vld [vmem:[#allocation2 + $0x18] sm:$0xff]
    %v277 = vpack.c.bf16 %v275, %v275
    %279 = vrot.lane.b32.xlu0 %v277, 64
    %v280 = vpop.permute.xlu0 %279
    %v282 = vsel %vm151, %v280, 0
    %284 = vmatpush.bf16.msra.mxu0 0
    %285 = vmatpush.bf16.msra.mxu0 0
    %286 = vmatpush.bf16.msra.mxu0 0
    %287 = vmatpush.bf16.msra.mxu0 0
    %288 = vmatpush.bf16.msra.mxu0 0
    %289 = vmatpush.bf16.msra.mxu0 0
    %290 = vmatpush.bf16.msra.mxu0 %v144
    %291 = vmatpush.bf16.msra.mxu0 %v143
    %292 = vmatmul.bf16.gmra.mxu0 %v282
    %v293 = vpop.f32.mrf.mxu0
    %v294 = vadd.f32 0.0, %v293
    %v295 = vpop.f32.mrf.mxu0
    %296 = vdwg.mxu0
    %v297 = vadd.f32 %v276, %v294
    %v298 = vmul.f32 %v297, %v148
    %v299 = vtanh.pop %v298
    %v300 = vmul.f32 %v299, %v148
    %v301 = vadd.f32 %v300, %v149
    %v302 = vmul.f32 %v301, %v269
    %304 = vrot.lane.b32.xlu0 %v301, 32
    %v305 = vpop.permute.xlu0 %304
    %v307 = vmul.f32 %v301, %v305
    %309 = vrot.lane.b32.xlu0 %v307, 32
    %v310 = vpop.permute.xlu0 %309
    %v312 = vadd.f32 %v302, %v310
    %v313 = vtanh.pop %v312
    %315 = vrot.lane.b32.xlu0 %v313, 32
    %v316 = vpop.permute.xlu0 %315
    %v318 = vmul.f32 %v301, %v316
    %v319 = vld [vmem:[#allocation2 + $0x20] sm:$0xff]
    %v320 = vpack.c.bf16 %v318, %v318
    %322 = vrot.lane.b32.xlu0 %v320, 64
    %v323 = vpop.permute.xlu0 %322
    %v325 = vsel %vm151, %v323, 0
    %327 = vmatpush.bf16.msra.mxu0 0
    %328 = vmatpush.bf16.msra.mxu0 0
    %329 = vmatpush.bf16.msra.mxu0 0
    %330 = vmatpush.bf16.msra.mxu0 0
    %331 = vmatpush.bf16.msra.mxu0 0
    %332 = vmatpush.bf16.msra.mxu0 0
    %333 = vmatpush.bf16.msra.mxu0 %v144
    %334 = vmatpush.bf16.msra.mxu0 %v143
    %335 = vmatmul.bf16.gmra.mxu0 %v325
    %v336 = vpop.f32.mrf.mxu0
    %v337 = vadd.f32 0.0, %v336
    %v338 = vpop.f32.mrf.mxu0
    %339 = vdwg.mxu0
    %v340 = vadd.f32 %v319, %v337
    %v341 = vmul.f32 %v340, %v148
    %v342 = vtanh.pop %v341
    %v343 = vmul.f32 %v342, %v148
    %v344 = vadd.f32 %v343, %v149
    %v345 = vmul.f32 %v344, %v312
    %347 = vrot.lane.b32.xlu0 %v344, 32
    %v348 = vpop.permute.xlu0 %347
    %v350 = vmul.f32 %v344, %v348
    %352 = vrot.lane.b32.xlu0 %v350, 32
    %v353 = vpop.permute.xlu0 %352
    %v355 = vadd.f32 %v345, %v353
    %v356 = vtanh.pop %v355
    %358 = vrot.lane.b32.xlu0 %v356, 32
    %v359 = vpop.permute.xlu0 %358
    %v361 = vmul.f32 %v344, %v359
    %v362 = vld [vmem:[#allocation2 + $0x28] sm:$0xff]
    %v363 = vpack.c.bf16 %v361, %v361
    %365 = vrot.lane.b32.xlu0 %v363, 64
    %v366 = vpop.permute.xlu0 %365
    %v368 = vsel %vm151, %v366, 0
    %370 = vmatpush.bf16.msra.mxu0 0
    %371 = vmatpush.bf16.msra.mxu0 0
    %372 = vmatpush.bf16.msra.mxu0 0
    %373 = vmatpush.bf16.msra.mxu0 0
    %374 = vmatpush.bf16.msra.mxu0 0
    %375 = vmatpush.bf16.msra.mxu0 0
    %376 = vmatpush.bf16.msra.mxu0 %v144
    %377 = vmatpush.bf16.msra.mxu0 %v143
    %378 = vmatmul.bf16.gmra.mxu0 %v368
    %v379 = vpop.f32.mrf.mxu0
    %v380 = vadd.f32 0.0, %v379
    %v381 = vpop.f32.mrf.mxu0
    %382 = vdwg.mxu0
    %v383 = vadd.f32 %v362, %v380
    %v384 = vmul.f32 %v383, %v148
    %v385 = vtanh.pop %v384
    %v386 = vmul.f32 %v385, %v148
    %v387 = vadd.f32 %v386, %v149
    %v388 = vmul.f32 %v387, %v355
    %390 = vrot.lane.b32.xlu0 %v387, 32
    %v391 = vpop.permute.xlu0 %390
    %v393 = vmul.f32 %v387, %v391
    %395 = vrot.lane.b32.xlu0 %v393, 32
    %v396 = vpop.permute.xlu0 %395
    %v398 = vadd.f32 %v388, %v396
    %v399 = vtanh.pop %v398
    %401 = vrot.lane.b32.xlu0 %v399, 32
    %v402 = vpop.permute.xlu0 %401
    %v404 = vmul.f32 %v387, %v402
    %v405 = vld [vmem:[#allocation2 + $0x30] sm:$0xff]
    %v406 = vpack.c.bf16 %v404, %v404
    %408 = vrot.lane.b32.xlu0 %v406, 64
    %v409 = vpop.permute.xlu0 %408
    %v411 = vsel %vm151, %v409, 0
    %413 = vmatpush.bf16.msra.mxu0 0
    %414 = vmatpush.bf16.msra.mxu0 0
    %415 = vmatpush.bf16.msra.mxu0 0
    %416 = vmatpush.bf16.msra.mxu0 0
    %417 = vmatpush.bf16.msra.mxu0 0
    %418 = vmatpush.bf16.msra.mxu0 0
    %419 = vmatpush.bf16.msra.mxu0 %v144
    %420 = vmatpush.bf16.msra.mxu0 %v143
    %421 = vmatmul.bf16.gmra.mxu0 %v411
    %v422 = vpop.f32.mrf.mxu0
    %v423 = vadd.f32 0.0, %v422
    %v424 = vpop.f32.mrf.mxu0
    %425 = vdwg.mxu0
    %v426 = vadd.f32 %v405, %v423
    %v427 = vmul.f32 %v426, %v148
    %v428 = vtanh.pop %v427
    %v429 = vmul.f32 %v428, %v148
    %v430 = vadd.f32 %v429, %v149
    %v431 = vmul.f32 %v430, %v398
    %433 = vrot.lane.b32.xlu0 %v430, 32
    %v434 = vpop.permute.xlu0 %433
    %v436 = vmul.f32 %v430, %v434
    %438 = vrot.lane.b32.xlu0 %v436, 32
    %v439 = vpop.permute.xlu0 %438
    %v441 = vadd.f32 %v431, %v439
    %v442 = vtanh.pop %v441
    %444 = vrot.lane.b32.xlu0 %v442, 32
    %v445 = vpop.permute.xlu0 %444
    %v447 = vmul.f32 %v430, %v445
    %v448 = vld [vmem:[#allocation2 + $0x38] sm:$0xff]
    %v449 = vpack.c.bf16 %v447, %v447
    %451 = vrot.lane.b32.xlu0 %v449, 64
    %v452 = vpop.permute.xlu0 %451
    %v454 = vsel %vm151, %v452, 0
    %456 = vmatpush.bf16.msra.mxu0 0
    %457 = vmatpush.bf16.msra.mxu0 0
    %458 = vmatpush.bf16.msra.mxu0 0
    %459 = vmatpush.bf16.msra.mxu0 0
    %460 = vmatpush.bf16.msra.mxu0 0
    %461 = vmatpush.bf16.msra.mxu0 0
    %462 = vmatpush.bf16.msra.mxu0 %v144
    %463 = vmatpush.bf16.msra.mxu0 %v143
    %464 = vmatmul.bf16.gmra.mxu0 %v454
    %v465 = vpop.f32.mrf.mxu0
    %v466 = vadd.f32 0.0, %v465
    %v467 = vpop.f32.mrf.mxu0
    %468 = vdwg.mxu0
    %v469 = vadd.f32 %v448, %v466
    %v470 = vmul.f32 %v469, %v148
    %v471 = vtanh.pop %v470
    %v472 = vmul.f32 %v471, %v148
    %v473 = vadd.f32 %v472, %v149
    %v474 = vmul.f32 %v473, %v441
    %476 = vrot.lane.b32.xlu0 %v473, 32
    %v477 = vpop.permute.xlu0 %476
    %v479 = vmul.f32 %v473, %v477
    %481 = vrot.lane.b32.xlu0 %v479, 32
    %v482 = vpop.permute.xlu0 %481
    %v484 = vadd.f32 %v474, %v482
    %v485 = vtanh.pop %v484
    %487 = vrot.lane.b32.xlu0 %v485, 32
    %v488 = vpop.permute.xlu0 %487
    %v490 = vmul.f32 %v473, %v488
    %492 = vrot.lane.b32.xlu0 %v490, 64
    %v493 = vpop.permute.xlu0 %492
    %495 = vst.msk [vmem:[#allocation3] sm:$0xff] %vm151, %v493
    // Predicated region
    $region10: #{vanilla_lstm_forward.1} parent=1 // pred_check
      _
    $region11: #{vanilla_lstm_forward.1} parent=1 // pred_check_branch
      %497 = sbr.rel (0) target = $region13
    $region12: #{vanilla_lstm_forward.1} parent=1 // pred_region
      %499 = vsyncadd [#allocation4], 0
      %s501 = sshll.u32 [#allocation3], 4
      %s502 = int_to_ptr.vmem [resolvable:$true] %s501
      %s503 = sshll.u32 %s2, 4
      %s504 = int_to_ptr.hbm [resolvable:$true] %s503
      %506 = dma.vmem_to_hbm [thread:$0]  %s502, 128, %s504, [#allocation4]
    $region13: #{vanilla_lstm_forward.1} parent=1 // pred_fallthru
      _
    // Predicated region
    $region14: #{vanilla_lstm_forward.1} parent=1 // pred_check
      _
    $region15: #{vanilla_lstm_forward.1} parent=1 // pred_check_branch
      %508 = sbr.rel (0) target = $region17
    $region16: #{vanilla_lstm_forward.1} parent=1 // pred_region
      %510 = dma.done [#allocation4], 128
    $region17: #{vanilla_lstm_forward.1} parent=1 // pred_fallthru
      _
    %511 = vsyncpa [#allocation4], 1

</llo_original>
